<compile_context>
chip_gen: v5e
topology: v5e:2x2
jax: 0.10.0
libtpu: 0.0.40
codegen_flags: <defaults>
</compile_context>

<pallas_src>
import functools

import jax
import jax.numpy as jnp
from jax.experimental import pallas as pl
from jax.experimental.pallas import tpu as pltpu

NEG_SLOPE = 0.01  # nn.LeakyReLU default
LANE = 128
SUBLANE = 8


def _round_up(x, m):
    return (x + m - 1) // m * m


def _leaky(x):
    # Identical to leaky_relu for 0 < slope < 1; single vmul + vmax instead of cmp+select.
    return jnp.maximum(x, NEG_SLOPE * x)


# ---------------------------------------------------------------------------
# Kernel
# ---------------------------------------------------------------------------
def chemgcn_kernel(data_ref, w_ref, b_ref, out_ref, *, BN, prow, n_conv, n_hidden):
    """data_ref: (BN, 2*128) packed [node|props , adj_blockdiag] (lane-aligned sections)
       w_ref:    (n_mats, 128, 128) packed weight slab (zero-padded rows/cols)
       b_ref:    (8k, 128) packed bias slab (zero-padded cols)
       out_ref:  (prow, 128) lane-dense output tile (cols >= n_outputs are zero)."""

    def dot(a, b):
        return jnp.dot(a, b, preferred_element_type=jnp.float32)

    # weight-slab layout
    i_init = 0
    i_conv0 = 1
    i_p2h = 1 + n_conv
    i_addh = i_p2h + 1
    i_addp = i_addh + 1
    i_hid = i_addp + 1
    i_out = i_hid + 1
    i_pool = i_out + 1
    # bias-slab layout
    ib_init, ib_conv0 = 0, 1
    ib_p2h = 1 + n_conv
    ib_add = ib_p2h + 1
    ib_hid = ib_add + 1
    ib_out = ib_hid + 1

    # Full-lane reads; zero-padded weight rows make the extra lanes inert.
    node = data_ref[:, 0:LANE]             # (BN,128): node fea at lanes [0,V), props at [V,V+P) rows<B
    adj = data_ref[:, LANE:LANE + BN]      # (BN,BN): block-diag adjacency, rows pre-scaled by 1/deg
    props_blk = data_ref[0:prow, 0:LANE]   # (prow,128): only lanes [V,V+P) hit nonzero W_addp rows

    # init_transform (Linear V -> F) over all B*N nodes at once
    fea = dot(node, w_ref[i_init]) + b_ref[ib_init:ib_init + 1, :]          # (BN,128), cols>=F zero

    # graph convolution layers: (diag(1/deg) @ adj) is pre-folded, so each layer is
    # two plain 2-D MXU matmuls thanks to the block-diagonal adjacency.
    for c in range(n_conv):
        agg = dot(adj, fea)
        fea = _leaky(dot(agg, w_ref[i_conv0 + c]) +
                     b_ref[ib_conv0 + c:ib_conv0 + c + 1, :])

    # mean pooling over nodes as a matmul with the precomputed (prow, BN) pooling
    # matrix, followed by the pooling activation. Rows >= B stay zero here and only
    # pick up leaky(bias) garbage below, which the final [:B] slice discards.
    pooled = _leaky(dot(w_ref[i_pool, 0:prow, 0:BN], fea))                  # (prow,128)

    # pooled_to_hidden + activation
    h = _leaky(dot(pooled, w_ref[i_p2h]) + b_ref[ib_p2h:ib_p2h + 1, :])
    # TODO(synk): nn.Dropout(p=0.0) is the identity (eval / p=0), intentionally omitted.

    # additional_props layer as a split matmul (no lane concat):
    #   concat([h, props]) @ W_add == h @ W_addh + props @ W_addp
    h = _leaky(dot(h, w_ref[i_addh]) + dot(props_blk, w_ref[i_addp]) +
               b_ref[ib_add:ib_add + 1, :])

    # (n_hidden - 1) applications of the *shared* hidden Linear + LeakyReLU
    for _ in range(n_hidden - 1):
        h = _leaky(dot(h, w_ref[i_hid]) + b_ref[ib_hid:ib_hid + 1, :])

    # hidden_to_output into a lane-dense (prow, 128) tile (padded weight cols are zero)
    out_ref[...] = dot(h, w_ref[i_out]) + b_ref[ib_out:ib_out + 1, :]


# ---------------------------------------------------------------------------
# Packing (parameters packed once; data packed per call inside jit)
# ---------------------------------------------------------------------------
def pack_params(params, *, B, N, V, F, H, P, n_conv):
    """Pack all weights into one (n_mats, 128, 128) slab and all biases into one
    (8k, 128) slab so the kernel prologue is 2 DMAs and every matmul is full-lane."""
    BN = B * N
    prow = _round_up(max(B, SUBLANE), SUBLANE)
    assert max(V + P, F, H, BN, prow) <= LANE
    n_mats = n_conv + 7           # init, conv*, p2h, add_h, add_p, hid, out, pool
    n_bias = n_conv + 5           # init, conv*, p2h, add, hid, out
    w_slab = jnp.zeros((n_mats, LANE, LANE), jnp.float32)
    b_slab = jnp.zeros((_round_up(n_bias, SUBLANE), LANE), jnp.float32)

    def put_w(slab, i, w, row_off=0):
        r, c = w.shape
        return slab.at[i, row_off:row_off + r, :c].set(w.astype(jnp.float32))

    def put_b(slab, i, b):
        b = jnp.reshape(b, (-1,)).astype(jnp.float32)
        return slab.at[i, :b.shape[0]].set(b)

    i_init = 0
    i_conv0 = 1
    i_p2h = 1 + n_conv
    i_addh = i_p2h + 1
    i_addp = i_addh + 1
    i_hid = i_addp + 1
    i_out = i_hid + 1
    i_pool = i_out + 1
    ib_init, ib_conv0 = 0, 1
    ib_p2h = 1 + n_conv
    ib_add = ib_p2h + 1
    ib_hid = ib_add + 1
    ib_out = ib_hid + 1

    w_slab = put_w(w_slab, i_init, params['w_init'])
    b_slab = put_b(b_slab, ib_init, params['b_init'])
    for c in range(n_conv):
        w_slab = put_w(w_slab, i_conv0 + c, params['w_conv'][c])
        b_slab = put_b(b_slab, ib_conv0 + c, params['b_conv'][c])
    w_slab = put_w(w_slab, i_p2h, params['w_p2h'])
    b_slab = put_b(b_slab, ib_p2h, params['b_p2h'])
    # split additional_props weight: h-part at rows [0,H); props-part at rows [V, V+P)
    # so it contracts directly against the packed data slab's props lanes.
    w_slab = put_w(w_slab, i_addh, params['w_addh'])
    w_slab = put_w(w_slab, i_addp, params['w_addp'], row_off=V)
    b_slab = put_b(b_slab, ib_add, params['b_add'])
    w_slab = put_w(w_slab, i_hid, params['w_hid'])
    b_slab = put_b(b_slab, ib_hid, params['b_hid'])
    w_slab = put_w(w_slab, i_out, params['w_out'])
    b_slab = put_b(b_slab, ib_out, params['b_out'])

    # mean-pooling matrix: row b (< B) holds 1/N over the node rows of graph b
    rows = jnp.arange(prow)[:, None]
    cols = jnp.arange(BN)[None, :]
    pool = jnp.where((cols // N == rows) & (rows < B), 1.0 / N, 0.0).astype(jnp.float32)
    w_slab = put_w(w_slab, i_pool, pool)
    return w_slab, b_slab


def pack_data(node_mat, adj_mat, props, *, prow):
    """Pack node features + additional props (one 128-lane section) and the
    degree-normalized block-diagonal adjacency (second section) into one
    (B*N, 2*128) slab -> a single input DMA."""
    B, N, V = node_mat.shape
    BN = B * N
    P = props.shape[1]
    assert BN >= prow, "need B*N >= 8 for the padded pooled-row layout"
    assert V + P <= LANE and BN <= LANE
    node_flat = node_mat.reshape(BN, V).astype(jnp.float32)
    # fold diag(1/deg) into the adjacency rows, then make it block-diagonal so each
    # conv layer is a single 2-D matmul.
    deg = adj_mat.sum(axis=-1, keepdims=True)                       # (B, N, 1)
    adj_norm = (adj_mat / deg).astype(jnp.float32)
    blk = adj_norm[:, :, None, :] * jnp.eye(B, dtype=jnp.float32)[:, None, :, None]
    adj_bd = blk.reshape(BN, BN)
    data = jnp.zeros((BN, 2 * LANE), jnp.float32)
    data = data.at[:, 0:V].set(node_flat)
    data = data.at[:B, V:V + P].set(props.astype(jnp.float32))
    data = data.at[:, LANE:LANE + BN].set(adj_bd)
    return data


# ---------------------------------------------------------------------------
# Forward wrapper
# ---------------------------------------------------------------------------
@functools.partial(jax.jit, static_argnames=(
    "node_fea_len", "hidden_fea_len", "n_outputs", "n_conv", "n_hidden"))
def chemgcn_forward(node_mat, adj_mat, additional_props, w_slab, b_slab, *,
                    node_fea_len, hidden_fea_len, n_outputs, n_conv, n_hidden):
    B, N, _ = node_mat.shape
    prow = _round_up(max(B, SUBLANE), SUBLANE)
    data = pack_data(node_mat, adj_mat, additional_props, prow=prow)

    kernel = functools.partial(
        chemgcn_kernel, BN=B * N, prow=prow, n_conv=n_conv, n_hidden=n_hidden)
    vmem = pl.BlockSpec(memory_space=pltpu.MemorySpace.VMEM)
    out_padded = pl.pallas_call(
        kernel,
        out_shape=jax.ShapeDtypeStruct((prow, LANE), jnp.float32),
        in_specs=[vmem, vmem, vmem],
        out_specs=vmem,
    )(data, w_slab, b_slab)
    return out_padded[:B, :n_outputs]


# ---------------------------------------------------------------------------
# Pure-JAX reference (mirror of the PyTorch forward) for correctness checking
# ---------------------------------------------------------------------------
def chemgcn_reference(node_mat, adj_mat, props, params, *, n_conv, n_hidden):
    leaky = lambda x: jnp.where(x >= 0, x, NEG_SLOPE * x)
    mm = lambda a, b: jnp.matmul(a, b, precision=jax.lax.Precision.HIGHEST)
    fea = mm(node_mat, params['w_init']) + params['b_init']
    deg = adj_mat.sum(-1, keepdims=True)
    for c in range(n_conv):
        fea = mm(adj_mat, fea) / deg
        fea = leaky(mm(fea, params['w_conv'][c]) + params['b_conv'][c])
    pooled = leaky(fea.mean(axis=1))
    h = leaky(mm(pooled, params['w_p2h']) + params['b_p2h'])
    comb = jnp.concatenate([h, props], axis=1)
    w_add = jnp.concatenate([params['w_addh'], params['w_addp']], axis=0)
    h = leaky(mm(comb, w_add) + params['b_add'])
    for _ in range(n_hidden - 1):
        h = leaky(mm(h, params['w_hid']) + params['b_hid'])
    return mm(h, params['w_out']) + params['b_out']


def _init_linear(key, fan_in, fan_out):
    k1, k2 = jax.random.split(key)
    bound = 1.0 / float(fan_in) ** 0.5
    w = jax.random.uniform(k1, (fan_in, fan_out), jnp.float32, -bound, bound)
    b = jax.random.uniform(k2, (1, fan_out), jnp.float32, -bound, bound)
    return w, b


if __name__ == "__main__":
    # Small shapes consistent with the module's forward.
    B, N = 2, 8                       # batch, nodes per graph
    NODE_VEC_LEN = 16                 # node_vec_len
    F = 32                            # node_fea_len
    H = 32                            # hidden_fea_len
    P = 4                             # n_additional_props
    O = 2                             # n_outputs
    N_CONV, N_HIDDEN = 2, 2

    root = jax.random.PRNGKey(0)
    keys = jax.random.split(root, 16)

    # Parameters (deterministic, PyTorch-Linear-style uniform init).
    w_init, b_init = _init_linear(keys[0], NODE_VEC_LEN, F)
    conv_ws, conv_bs = [], []
    for c in range(N_CONV):
        w, b = _init_linear(keys[1 + c], F, F)
        conv_ws.append(w)
        conv_bs.append(b)
    w_conv = jnp.stack(conv_ws)                     # (n_conv, F, F)
    b_conv = jnp.stack(conv_bs)                     # (n_conv, 1, F)
    w_p2h, b_p2h = _init_linear(keys[5], F, H)
    w_add_full, b_add = _init_linear(keys[6], H + P, H)
    w_addh, w_addp = w_add_full[:H], w_add_full[H:]
    w_hid, b_hid = _init_linear(keys[7], H, H)
    w_out, b_out = _init_linear(keys[8], H, O)

    params = dict(w_init=w_init, b_init=b_init,
                  w_conv=w_conv, b_conv=b_conv,
                  w_p2h=w_p2h, b_p2h=b_p2h,
                  w_addh=w_addh, w_addp=w_addp, b_add=b_add,
                  w_hid=w_hid, b_hid=b_hid,
                  w_out=w_out, b_out=b_out)

    # One-time packing of all weights/biases into two VMEM slabs.
    w_slab, b_slab = pack_params(params, B=B, N=N, V=NODE_VEC_LEN, F=F, H=H, P=P,
                                 n_conv=N_CONV)

    # Inputs.
    node_mat = jax.random.normal(keys[9], (B, N, NODE_VEC_LEN), jnp.float32)
    rand = (jax.random.uniform(keys[10], (B, N, N)) < 0.4).astype(jnp.float32)
    adj_mat = jnp.maximum(rand, jnp.transpose(rand, (0, 2, 1)))
    adj_mat = jnp.maximum(adj_mat, jnp.eye(N, dtype=jnp.float32)[None])  # self-loops -> degree >= 1
    additional_props = jax.random.normal(keys[11], (B, P), jnp.float32)

    out = chemgcn_forward(node_mat, adj_mat, additional_props, w_slab, b_slab,
                          node_fea_len=F, hidden_fea_len=H, n_outputs=O,
                          n_conv=N_CONV, n_hidden=N_HIDDEN)
    out = jax.block_until_ready(out)

    ref = chemgcn_reference(node_mat, adj_mat, additional_props, params,
                            n_conv=N_CONV, n_hidden=N_HIDDEN)
    assert out.shape == (B, O)
    # Kernel and reference are both pure f32 -> tight tolerance catches packing bugs.
    assert jnp.allclose(out, ref, rtol=1e-4, atol=1e-5), (out, ref)

    print("KERNEL_OK")
</pallas_src>

<mosaic_0001>
module attributes {stable_mosaic.version = 11 : i64} {
  func.func @chemgcn_kernel(%arg0: memref<16x256xf32, #tpu.memory_space<vmem>>, %arg1: memref<9x128x128xf32, #tpu.memory_space<vmem>>, %arg2: memref<8x128xf32, #tpu.memory_space<vmem>>, %arg3: memref<8x128xf32, #tpu.memory_space<vmem>>) attributes {dimension_semantics = [], scalar_prefetch = 0 : i64, scratch_operands = 0 : i64, tpu.core_type = #tpu.core_type<tc>} {
    %c0 = arith.constant 0 : index
    %c0_0 = arith.constant 0 : index
    %0 = vector.load %arg0[%c0, %c0_0] : memref<16x256xf32, #tpu.memory_space<vmem>>, vector<16x128xf32>
    %c0_1 = arith.constant 0 : index
    %c128 = arith.constant 128 : index
    %1 = vector.load %arg0[%c0_1, %c128] : memref<16x256xf32, #tpu.memory_space<vmem>>, vector<16x16xf32>
    %c0_2 = arith.constant 0 : index
    %c0_3 = arith.constant 0 : index
    %2 = vector.load %arg0[%c0_2, %c0_3] : memref<16x256xf32, #tpu.memory_space<vmem>>, vector<8x128xf32>
    %c0_4 = arith.constant 0 : index
    %c0_5 = arith.constant 0 : index
    %c0_6 = arith.constant 0 : index
    %3 = vector.load %arg1[%c0_4, %c0_5, %c0_6] : memref<9x128x128xf32, #tpu.memory_space<vmem>>, vector<1x128x128xf32>
    %4 = vector.shape_cast %3 : vector<1x128x128xf32> to vector<128x128xf32>
    %cst = arith.constant dense<0.000000e+00> : vector<16x128xf32>
    %5 = tpu.matmul %0, %4, %cst {dimension_numbers = #tpu.dot_dimension_numbers<[1], [0], [0], [1], [0, 0, 1, 1], [], []>} : vector<16x128xf32>, vector<128x128xf32>, vector<16x128xf32> -> vector<16x128xf32>
    %c0_7 = arith.constant 0 : index
    %c0_8 = arith.constant 0 : index
    %6 = vector.load %arg2[%c0_7, %c0_8] : memref<8x128xf32, #tpu.memory_space<vmem>>, vector<1x128xf32>
    %7 = vector.broadcast %6 : vector<1x128xf32> to vector<16x128xf32>
    %8 = arith.addf %5, %7 : vector<16x128xf32>
    %cst_9 = arith.constant dense<0.000000e+00> : vector<16x128xf32>
    %9 = tpu.matmul %1, %8, %cst_9 {dimension_numbers = #tpu.dot_dimension_numbers<[1], [0], [0], [1], [0, 0, 1, 1], [], []>} : vector<16x16xf32>, vector<16x128xf32>, vector<16x128xf32> -> vector<16x128xf32>
    %c1 = arith.constant 1 : index
    %c0_10 = arith.constant 0 : index
    %c0_11 = arith.constant 0 : index
    %10 = vector.load %arg1[%c1, %c0_10, %c0_11] : memref<9x128x128xf32, #tpu.memory_space<vmem>>, vector<1x128x128xf32>
    %11 = vector.shape_cast %10 : vector<1x128x128xf32> to vector<128x128xf32>
    %cst_12 = arith.constant dense<0.000000e+00> : vector<16x128xf32>
    %12 = tpu.matmul %9, %11, %cst_12 {dimension_numbers = #tpu.dot_dimension_numbers<[1], [0], [0], [1], [0, 0, 1, 1], [], []>} : vector<16x128xf32>, vector<128x128xf32>, vector<16x128xf32> -> vector<16x128xf32>
    %c1_13 = arith.constant 1 : index
    %c0_14 = arith.constant 0 : index
    %13 = vector.load %arg2[%c1_13, %c0_14] : memref<8x128xf32, #tpu.memory_space<vmem>>, vector<1x128xf32>
    %14 = vector.broadcast %13 : vector<1x128xf32> to vector<16x128xf32>
    %15 = arith.addf %12, %14 : vector<16x128xf32>
    %cst_15 = arith.constant 0.00999999977 : f32
    %16 = vector.broadcast %cst_15 : f32 to vector<16x128xf32>
    %17 = arith.mulf %16, %15 : vector<16x128xf32>
    %18 = arith.maximumf %15, %17 : vector<16x128xf32>
    %cst_16 = arith.constant dense<0.000000e+00> : vector<16x128xf32>
    %19 = tpu.matmul %1, %18, %cst_16 {dimension_numbers = #tpu.dot_dimension_numbers<[1], [0], [0], [1], [0, 0, 1, 1], [], []>} : vector<16x16xf32>, vector<16x128xf32>, vector<16x128xf32> -> vector<16x128xf32>
    %c2 = arith.constant 2 : index
    %c0_17 = arith.constant 0 : index
    %c0_18 = arith.constant 0 : index
    %20 = vector.load %arg1[%c2, %c0_17, %c0_18] : memref<9x128x128xf32, #tpu.memory_space<vmem>>, vector<1x128x128xf32>
    %21 = vector.shape_cast %20 : vector<1x128x128xf32> to vector<128x128xf32>
    %cst_19 = arith.constant dense<0.000000e+00> : vector<16x128xf32>
    %22 = tpu.matmul %19, %21, %cst_19 {dimension_numbers = #tpu.dot_dimension_numbers<[1], [0], [0], [1], [0, 0, 1, 1], [], []>} : vector<16x128xf32>, vector<128x128xf32>, vector<16x128xf32> -> vector<16x128xf32>
    %c2_20 = arith.constant 2 : index
    %c0_21 = arith.constant 0 : index
    %23 = vector.load %arg2[%c2_20, %c0_21] : memref<8x128xf32, #tpu.memory_space<vmem>>, vector<1x128xf32>
    %24 = vector.broadcast %23 : vector<1x128xf32> to vector<16x128xf32>
    %25 = arith.addf %22, %24 : vector<16x128xf32>
    %cst_22 = arith.constant 0.00999999977 : f32
    %26 = vector.broadcast %cst_22 : f32 to vector<16x128xf32>
    %27 = arith.mulf %26, %25 : vector<16x128xf32>
    %28 = arith.maximumf %25, %27 : vector<16x128xf32>
    %c8 = arith.constant 8 : index
    %c0_23 = arith.constant 0 : index
    %c0_24 = arith.constant 0 : index
    %29 = vector.load %arg1[%c8, %c0_23, %c0_24] : memref<9x128x128xf32, #tpu.memory_space<vmem>>, vector<1x8x16xf32>
    %30 = vector.shape_cast %29 : vector<1x8x16xf32> to vector<8x16xf32>
    %cst_25 = arith.constant dense<0.000000e+00> : vector<8x128xf32>
    %31 = tpu.matmul %30, %28, %cst_25 {dimension_numbers = #tpu.dot_dimension_numbers<[1], [0], [0], [1], [0, 0, 1, 1], [], []>} : vector<8x16xf32>, vector<16x128xf32>, vector<8x128xf32> -> vector<8x128xf32>
    %cst_26 = arith.constant 0.00999999977 : f32
    %32 = vector.broadcast %cst_26 : f32 to vector<8x128xf32>
    %33 = arith.mulf %32, %31 : vector<8x128xf32>
    %34 = arith.maximumf %31, %33 : vector<8x128xf32>
    %c3 = arith.constant 3 : index
    %c0_27 = arith.constant 0 : index
    %c0_28 = arith.constant 0 : index
    %35 = vector.load %arg1[%c3, %c0_27, %c0_28] : memref<9x128x128xf32, #tpu.memory_space<vmem>>, vector<1x128x128xf32>
    %36 = vector.shape_cast %35 : vector<1x128x128xf32> to vector<128x128xf32>
    %cst_29 = arith.constant dense<0.000000e+00> : vector<8x128xf32>
    %37 = tpu.matmul %34, %36, %cst_29 {dimension_numbers = #tpu.dot_dimension_numbers<[1], [0], [0], [1], [0, 0, 1, 1], [], []>} : vector<8x128xf32>, vector<128x128xf32>, vector<8x128xf32> -> vector<8x128xf32>
    %c3_30 = arith.constant 3 : index
    %c0_31 = arith.constant 0 : index
    %38 = vector.load %arg2[%c3_30, %c0_31] : memref<8x128xf32, #tpu.memory_space<vmem>>, vector<1x128xf32>
    %39 = vector.broadcast %38 : vector<1x128xf32> to vector<8x128xf32>
    %40 = arith.addf %37, %39 : vector<8x128xf32>
    %cst_32 = arith.constant 0.00999999977 : f32
    %41 = vector.broadcast %cst_32 : f32 to vector<8x128xf32>
    %42 = arith.mulf %41, %40 : vector<8x128xf32>
    %43 = arith.maximumf %40, %42 : vector<8x128xf32>
    %c4 = arith.constant 4 : index
    %c0_33 = arith.constant 0 : index
    %c0_34 = arith.constant 0 : index
    %44 = vector.load %arg1[%c4, %c0_33, %c0_34] : memref<9x128x128xf32, #tpu.memory_space<vmem>>, vector<1x128x128xf32>
    %45 = vector.shape_cast %44 : vector<1x128x128xf32> to vector<128x128xf32>
    %cst_35 = arith.constant dense<0.000000e+00> : vector<8x128xf32>
    %46 = tpu.matmul %43, %45, %cst_35 {dimension_numbers = #tpu.dot_dimension_numbers<[1], [0], [0], [1], [0, 0, 1, 1], [], []>} : vector<8x128xf32>, vector<128x128xf32>, vector<8x128xf32> -> vector<8x128xf32>
    %c5 = arith.constant 5 : index
    %c0_36 = arith.constant 0 : index
    %c0_37 = arith.constant 0 : index
    %47 = vector.load %arg1[%c5, %c0_36, %c0_37] : memref<9x128x128xf32, #tpu.memory_space<vmem>>, vector<1x128x128xf32>
    %48 = vector.shape_cast %47 : vector<1x128x128xf32> to vector<128x128xf32>
    %cst_38 = arith.constant dense<0.000000e+00> : vector<8x128xf32>
    %49 = tpu.matmul %2, %48, %cst_38 {dimension_numbers = #tpu.dot_dimension_numbers<[1], [0], [0], [1], [0, 0, 1, 1], [], []>} : vector<8x128xf32>, vector<128x128xf32>, vector<8x128xf32> -> vector<8x128xf32>
    %50 = arith.addf %46, %49 : vector<8x128xf32>
    %c4_39 = arith.constant 4 : index
    %c0_40 = arith.constant 0 : index
    %51 = vector.load %arg2[%c4_39, %c0_40] : memref<8x128xf32, #tpu.memory_space<vmem>>, vector<1x128xf32>
    %52 = vector.broadcast %51 : vector<1x128xf32> to vector<8x128xf32>
    %53 = arith.addf %50, %52 : vector<8x128xf32>
    %cst_41 = arith.constant 0.00999999977 : f32
    %54 = vector.broadcast %cst_41 : f32 to vector<8x128xf32>
    %55 = arith.mulf %54, %53 : vector<8x128xf32>
    %56 = arith.maximumf %53, %55 : vector<8x128xf32>
    %c6 = arith.constant 6 : index
    %c0_42 = arith.constant 0 : index
    %c0_43 = arith.constant 0 : index
    %57 = vector.load %arg1[%c6, %c0_42, %c0_43] : memref<9x128x128xf32, #tpu.memory_space<vmem>>, vector<1x128x128xf32>
    %58 = vector.shape_cast %57 : vector<1x128x128xf32> to vector<128x128xf32>
    %cst_44 = arith.constant dense<0.000000e+00> : vector<8x128xf32>
    %59 = tpu.matmul %56, %58, %cst_44 {dimension_numbers = #tpu.dot_dimension_numbers<[1], [0], [0], [1], [0, 0, 1, 1], [], []>} : vector<8x128xf32>, vector<128x128xf32>, vector<8x128xf32> -> vector<8x128xf32>
    %c5_45 = arith.constant 5 : index
    %c0_46 = arith.constant 0 : index
    %60 = vector.load %arg2[%c5_45, %c0_46] : memref<8x128xf32, #tpu.memory_space<vmem>>, vector<1x128xf32>
    %61 = vector.broadcast %60 : vector<1x128xf32> to vector<8x128xf32>
    %62 = arith.addf %59, %61 : vector<8x128xf32>
    %cst_47 = arith.constant 0.00999999977 : f32
    %63 = vector.broadcast %cst_47 : f32 to vector<8x128xf32>
    %64 = arith.mulf %63, %62 : vector<8x128xf32>
    %65 = arith.maximumf %62, %64 : vector<8x128xf32>
    %c7 = arith.constant 7 : index
    %c0_48 = arith.constant 0 : index
    %c0_49 = arith.constant 0 : index
    %66 = vector.load %arg1[%c7, %c0_48, %c0_49] : memref<9x128x128xf32, #tpu.memory_space<vmem>>, vector<1x128x128xf32>
    %67 = vector.shape_cast %66 : vector<1x128x128xf32> to vector<128x128xf32>
    %cst_50 = arith.constant dense<0.000000e+00> : vector<8x128xf32>
    %68 = tpu.matmul %65, %67, %cst_50 {dimension_numbers = #tpu.dot_dimension_numbers<[1], [0], [0], [1], [0, 0, 1, 1], [], []>} : vector<8x128xf32>, vector<128x128xf32>, vector<8x128xf32> -> vector<8x128xf32>
    %c6_51 = arith.constant 6 : index
    %c0_52 = arith.constant 0 : index
    %69 = vector.load %arg2[%c6_51, %c0_52] : memref<8x128xf32, #tpu.memory_space<vmem>>, vector<1x128xf32>
    %70 = vector.broadcast %69 : vector<1x128xf32> to vector<8x128xf32>
    %71 = arith.addf %68, %70 : vector<8x128xf32>
    %c0_53 = arith.constant 0 : index
    %c0_54 = arith.constant 0 : index
    %72 = vector.load %arg3[%c0_53, %c0_54] : memref<8x128xf32, #tpu.memory_space<vmem>>, vector<8x128xf32>
    tpu.vector_store %arg3[%c0_53, %c0_54], %71 {strides = array<i32>} : memref<8x128xf32, #tpu.memory_space<vmem>>, vector<8x128xf32>,
    return
  }
}

</mosaic_0001>

<llo_original>
// kernel: chemgcn_forward.1
$region0: #{chemgcn_forward.1}
  #allocation0 [shape = 'u32[]', space=smem, size = 0x4, offset = 0x4, fixed_abs, tag = 'smem constant byte address 0x4 - core index']
  #allocation1 [shape = 'u32[72,128]{1,0:T(1,128)}', space=vmem, size = 0x9000, scoped, tag = 'internal scratch']
  %s0 = inlined_call_operand.vmem [shape: f32[16,256], index: 0, kind: input, shape index: {}]
  %s1 = inlined_call_operand.hbm [shape: f32[9,128,128], index: 1, kind: input, shape index: {}]
  %s2 = inlined_call_operand.vmem [shape: f32[8,128], index: 2, kind: input, shape index: {}]
  %s3 = inlined_call_operand.vmem [shape: f32[8,128], index: 3, kind: output, shape index: {}]
  %s4 = sld [smem:[#allocation0]]
  $region26: #{chemgcn_forward.1} parent=0
    _
  %s6 = ssub.s32 1, %s4
  %s7 = scalar_select 0, %s6, %s4
  $region1: #{chemgcn_forward.1} parent=0
    #allocation2 [shape = 'u8[589824]{0}', space=vmem, size = 0x90000, scoped, tag = 'input window, operand 1, single buffered']
    #allocation3 [shape = 's32[1]{0}', space=sflag, size = 0x4, scoped, tag = 'scoped memory for chemgcn_forward.1']
    %8 = vsyncpa [#allocation3], 0
    // Predicated region
    $region2: #{chemgcn_forward.1} parent=1 // pred_check
      _
    $region3: #{chemgcn_forward.1} parent=1 // pred_check_branch
      %10 = sbr.rel (0) target = $region5
    $region4: #{chemgcn_forward.1} parent=1 // pred_region
      _
    $region5: #{chemgcn_forward.1} parent=1 // pred_fallthru
      _
    // Predicated region
    $region6: #{chemgcn_forward.1} parent=1 // pred_check
      _
    $region7: #{chemgcn_forward.1} parent=1 // pred_check_branch
      %12 = sbr.rel (0) target = $region9
    $region8: #{chemgcn_forward.1} parent=1 // pred_region
      %14 = vsyncadd [#allocation3], 0
      %s15 = sshll.u32 %s1, 4
      %s16 = int_to_ptr.hbm [resolvable:$true] %s15
      %s17 = sshll.u32 [#allocation2], 4
      %s18 = int_to_ptr.vmem [resolvable:$true] %s17
      %23 = dma.hbm_to_vmem [thread:$0]  %s16, 18432, %s18, [#allocation3], 128, 128, 8
    $region9: #{chemgcn_forward.1} parent=1 // pred_fallthru
      _
    // Predicated region
    $region10: #{chemgcn_forward.1} parent=1 // pred_check
      _
    $region11: #{chemgcn_forward.1} parent=1 // pred_check_branch
      %25 = sbr.rel (0) target = $region13
    $region12: #{chemgcn_forward.1} parent=1 // pred_region
      _
    $region13: #{chemgcn_forward.1} parent=1 // pred_fallthru
      _
    // Predicated region
    $region14: #{chemgcn_forward.1} parent=1 // pred_check
      _
    $region15: #{chemgcn_forward.1} parent=1 // pred_check_branch
      %27 = sbr.rel (0) target = $region17
    $region16: #{chemgcn_forward.1} parent=1 // pred_region
      %29 = dma.done [#allocation3], 18432
    $region17: #{chemgcn_forward.1} parent=1 // pred_fallthru
      _
    %v30 = vld [vmem:[%s0] sm:$0xff]
    %v31 = vld [vmem:[%s0 + $0x10] sm:$0xff]
    %v32 = vld [vmem:[%s0 + $0x8] sm:$0xff]
    %v33 = vld [vmem:[%s0 + $0x18] sm:$0xff]
    %v34 = vld [vmem:[#allocation2] sm:$0xff]
    %v35 = vld [vmem:[#allocation2 + $0x8] sm:$0xff]
    %v36 = vld [vmem:[#allocation2 + $0x10] sm:$0xff]
    %v37 = vld [vmem:[#allocation2 + $0x18] sm:$0xff]
    %v38 = vld [vmem:[#allocation2 + $0x20] sm:$0xff]
    %v39 = vld [vmem:[#allocation2 + $0x28] sm:$0xff]
    %v40 = vld [vmem:[#allocation2 + $0x30] sm:$0xff]
    %v41 = vld [vmem:[#allocation2 + $0x38] sm:$0xff]
    %v42 = vld [vmem:[#allocation2 + $0x40] sm:$0xff]
    %v43 = vld [vmem:[#allocation2 + $0x48] sm:$0xff]
    %v44 = vld [vmem:[#allocation2 + $0x50] sm:$0xff]
    %v45 = vld [vmem:[#allocation2 + $0x58] sm:$0xff]
    %v46 = vld [vmem:[#allocation2 + $0x60] sm:$0xff]
    %v47 = vld [vmem:[#allocation2 + $0x68] sm:$0xff]
    %v48 = vld [vmem:[#allocation2 + $0x70] sm:$0xff]
    %v49 = vld [vmem:[#allocation2 + $0x78] sm:$0xff]
    %v50 = vld [vmem:[%s2] sm:$0x1]
    %v51 = vperm.slane %v50, 0
    %52 = vmatpush.msra.mxu0 %v49
    %53 = vmatpush.msra.mxu0 %v48
    %54 = vmatpush.msra.mxu0 %v47
    %55 = vmatpush.msra.mxu0 %v46
    %56 = vmatpush.msra.mxu0 %v45
    %57 = vmatpush.msra.mxu0 %v44
    %58 = vmatpush.msra.mxu0 %v43
    %59 = vmatpush.msra.mxu0 %v42
    %60 = vmatpush.msra.mxu0 %v41
    %61 = vmatpush.msra.mxu0 %v40
    %62 = vmatpush.msra.mxu0 %v39
    %63 = vmatpush.msra.mxu0 %v38
    %64 = vmatpush.msra.mxu0 %v37
    %65 = vmatpush.msra.mxu0 %v36
    %66 = vmatpush.msra.mxu0 %v35
    %67 = vmatpush.msra.mxu0 %v34
    %68 = vmatmul.f32.gmra.mxu0 %v30
    %v69 = vpop.f32.mrf.mxu0
    %v70 = vadd.f32 %v51, %v69
    %71 = vmatmul.f32.gmra.mxu0 %v31
    %v72 = vpop.f32.mrf.mxu0
    %v73 = vadd.f32 %v51, %v72
    %74 = vdwg.mxu0
    %vm75 = vcmask 130048
    %v77 = vsel %vm75, %v32, 0
    %v80 = vsel %vm75, %v33, 0
    %82 = vmatpush.msra.mxu0 0.0
    %83 = vmatpush.msra.mxu0 0.0
    %84 = vmatpush.msra.mxu0 0.0
    %85 = vmatpush.msra.mxu0 0.0
    %86 = vmatpush.msra.mxu0 0.0
    %87 = vmatpush.msra.mxu0 0.0
    %88 = vmatpush.msra.mxu0 0.0
    %89 = vmatpush.msra.mxu0 0.0
    %90 = vmatpush.msra.mxu0 0.0
    %91 = vmatpush.msra.mxu0 0.0
    %92 = vmatpush.msra.mxu0 0.0
    %93 = vmatpush.msra.mxu0 0.0
    %94 = vmatpush.msra.mxu0 0.0
    %95 = vmatpush.msra.mxu0 0.0
    %96 = vmatpush.msra.mxu0 %v73
    %97 = vmatpush.msra.mxu0 %v70
    %98 = vmatmul.f32.gmra.mxu0 %v77
    %v99 = vpop.f32.mrf.mxu0
    %v100 = vadd.f32 0.0, %v99
    %101 = vmatmul.f32.gmra.mxu0 %v80
    %v102 = vpop.f32.mrf.mxu0
    %v103 = vadd.f32 0.0, %v102
    %104 = vdwg.mxu0
    %s105 = scalar_lea.vmem [#allocation2], 128
    %v106 = vld [vmem:[%s105] sm:$0xff]
    %v107 = vld [vmem:[%s105 + $0x8] sm:$0xff]
    %v108 = vld [vmem:[%s105 + $0x10] sm:$0xff]
    %v109 = vld [vmem:[%s105 + $0x18] sm:$0xff]
    %v110 = vld [vmem:[%s105 + $0x20] sm:$0xff]
    %v111 = vld [vmem:[%s105 + $0x28] sm:$0xff]
    %v112 = vld [vmem:[%s105 + $0x30] sm:$0xff]
    %v113 = vld [vmem:[%s105 + $0x38] sm:$0xff]
    %v114 = vld [vmem:[%s105 + $0x40] sm:$0xff]
    %v115 = vld [vmem:[%s105 + $0x48] sm:$0xff]
    %v116 = vld [vmem:[%s105 + $0x50] sm:$0xff]
    %v117 = vld [vmem:[%s105 + $0x58] sm:$0xff]
    %v118 = vld [vmem:[%s105 + $0x60] sm:$0xff]
    %v119 = vld [vmem:[%s105 + $0x68] sm:$0xff]
    %v120 = vld [vmem:[%s105 + $0x70] sm:$0xff]
    %v121 = vld [vmem:[%s105 + $0x78] sm:$0xff]
    %v122 = vld [vmem:[%s2 + $0x1] sm:$0x1]
    %v123 = vperm.slane %v122, 0
    %124 = vmatpush.msra.mxu0 %v121
    %125 = vmatpush.msra.mxu0 %v120
    %126 = vmatpush.msra.mxu0 %v119
    %127 = vmatpush.msra.mxu0 %v118
    %128 = vmatpush.msra.mxu0 %v117
    %129 = vmatpush.msra.mxu0 %v116
    %130 = vmatpush.msra.mxu0 %v115
    %131 = vmatpush.msra.mxu0 %v114
    %132 = vmatpush.msra.mxu0 %v113
    %133 = vmatpush.msra.mxu0 %v112
    %134 = vmatpush.msra.mxu0 %v111
    %135 = vmatpush.msra.mxu0 %v110
    %136 = vmatpush.msra.mxu0 %v109
    %137 = vmatpush.msra.mxu0 %v108
    %138 = vmatpush.msra.mxu0 %v107
    %139 = vmatpush.msra.mxu0 %v106
    %140 = vmatmul.f32.gmra.mxu0 %v100
    %v141 = vpop.f32.mrf.mxu0
    %v142 = vadd.f32 %v123, %v141
    %143 = vmatmul.f32.gmra.mxu0 %v103
    %v144 = vpop.f32.mrf.mxu0
    %v145 = vadd.f32 %v123, %v144
    %146 = vdwg.mxu0
    %v147 = vmul.f32 %v142, 0.01
    %v148 = vmul.f32 %v145, 0.01
    %v149 = vmax.f32 %v142, %v147
    %v150 = vmax.f32 %v145, %v148
    %151 = vmatpush.msra.mxu0 0.0
    %152 = vmatpush.msra.mxu0 0.0
    %153 = vmatpush.msra.mxu0 0.0
    %154 = vmatpush.msra.mxu0 0.0
    %155 = vmatpush.msra.mxu0 0.0
    %156 = vmatpush.msra.mxu0 0.0
    %157 = vmatpush.msra.mxu0 0.0
    %158 = vmatpush.msra.mxu0 0.0
    %159 = vmatpush.msra.mxu0 0.0
    %160 = vmatpush.msra.mxu0 0.0
    %161 = vmatpush.msra.mxu0 0.0
    %162 = vmatpush.msra.mxu0 0.0
    %163 = vmatpush.msra.mxu0 0.0
    %164 = vmatpush.msra.mxu0 0.0
    %165 = vmatpush.msra.mxu0 %v150
    %166 = vmatpush.msra.mxu0 %v149
    %167 = vmatmul.f32.gmra.mxu0 %v77
    %v168 = vpop.f32.mrf.mxu0
    %v169 = vadd.f32 0.0, %v168
    %170 = vmatmul.f32.gmra.mxu0 %v80
    %v171 = vpop.f32.mrf.mxu0
    %v172 = vadd.f32 0.0, %v171
    %173 = vdwg.mxu0
    %s174 = scalar_lea.vmem [#allocation2], 256
    %v175 = vld [vmem:[%s174] sm:$0xff]
    %v176 = vld [vmem:[%s174 + $0x8] sm:$0xff]
    %v177 = vld [vmem:[%s174 + $0x10] sm:$0xff]
    %v178 = vld [vmem:[%s174 + $0x18] sm:$0xff]
    %v179 = vld [vmem:[%s174 + $0x20] sm:$0xff]
    %v180 = vld [vmem:[%s174 + $0x28] sm:$0xff]
    %v181 = vld [vmem:[%s174 + $0x30] sm:$0xff]
    %v182 = vld [vmem:[%s174 + $0x38] sm:$0xff]
    %v183 = vld [vmem:[%s174 + $0x40] sm:$0xff]
    %v184 = vld [vmem:[%s174 + $0x48] sm:$0xff]
    %v185 = vld [vmem:[%s174 + $0x50] sm:$0xff]
    %v186 = vld [vmem:[%s174 + $0x58] sm:$0xff]
    %v187 = vld [vmem:[%s174 + $0x60] sm:$0xff]
    %v188 = vld [vmem:[%s174 + $0x68] sm:$0xff]
    %v189 = vld [vmem:[%s174 + $0x70] sm:$0xff]
    %v190 = vld [vmem:[%s174 + $0x78] sm:$0xff]
    %v191 = vld [vmem:[%s2 + $0x2] sm:$0x1]
    %v192 = vperm.slane %v191, 0
    %193 = vmatpush.msra.mxu0 %v190
    %194 = vmatpush.msra.mxu0 %v189
    %195 = vmatpush.msra.mxu0 %v188
    %196 = vmatpush.msra.mxu0 %v187
    %197 = vmatpush.msra.mxu0 %v186
    %198 = vmatpush.msra.mxu0 %v185
    %199 = vmatpush.msra.mxu0 %v184
    %200 = vmatpush.msra.mxu0 %v183
    %201 = vmatpush.msra.mxu0 %v182
    %202 = vmatpush.msra.mxu0 %v181
    %203 = vmatpush.msra.mxu0 %v180
    %204 = vmatpush.msra.mxu0 %v179
    %205 = vmatpush.msra.mxu0 %v178
    %206 = vmatpush.msra.mxu0 %v177
    %207 = vmatpush.msra.mxu0 %v176
    %208 = vmatpush.msra.mxu0 %v175
    %209 = vmatmul.f32.gmra.mxu0 %v169
    %v210 = vpop.f32.mrf.mxu0
    %v211 = vadd.f32 %v192, %v210
    %212 = vmatmul.f32.gmra.mxu0 %v172
    %v213 = vpop.f32.mrf.mxu0
    %v214 = vadd.f32 %v192, %v213
    %215 = vdwg.mxu0
    %v216 = vmul.f32 %v211, 0.01
    %v217 = vmul.f32 %v214, 0.01
    %v218 = vmax.f32 %v211, %v216
    %v219 = vmax.f32 %v214, %v217
    %s220 = scalar_lea.vmem [#allocation2], 1024
    %v221 = vld [vmem:[%s220] sm:$0xff]
    %v223 = vsel %vm75, %v221, 0
    %225 = vmatpush.msra.mxu0 0.0
    %226 = vmatpush.msra.mxu0 0.0
    %227 = vmatpush.msra.mxu0 0.0
    %228 = vmatpush.msra.mxu0 0.0
    %229 = vmatpush.msra.mxu0 0.0
    %230 = vmatpush.msra.mxu0 0.0
    %231 = vmatpush.msra.mxu0 0.0
    %232 = vmatpush.msra.mxu0 0.0
    %233 = vmatpush.msra.mxu0 0.0
    %234 = vmatpush.msra.mxu0 0.0
    %235 = vmatpush.msra.mxu0 0.0
    %236 = vmatpush.msra.mxu0 0.0
    %237 = vmatpush.msra.mxu0 0.0
    %238 = vmatpush.msra.mxu0 0.0
    %239 = vmatpush.msra.mxu0 %v219
    %240 = vmatpush.msra.mxu0 %v218
    %241 = vmatmul.f32.gmra.mxu0 %v223
    %v242 = vpop.f32.mrf.mxu0
    %v243 = vadd.f32 0.0, %v242
    %244 = vdwg.mxu0
    %v245 = vmul.f32 %v243, 0.01
    %v246 = vmax.f32 %v243, %v245
    %s247 = scalar_lea.vmem [#allocation2], 384
    %v248 = vld [vmem:[%s247] sm:$0xff]
    %v249 = vld [vmem:[%s247 + $0x8] sm:$0xff]
    %v250 = vld [vmem:[%s247 + $0x10] sm:$0xff]
    %v251 = vld [vmem:[%s247 + $0x18] sm:$0xff]
    %v252 = vld [vmem:[%s247 + $0x20] sm:$0xff]
    %v253 = vld [vmem:[%s247 + $0x28] sm:$0xff]
    %v254 = vld [vmem:[%s247 + $0x30] sm:$0xff]
    %v255 = vld [vmem:[%s247 + $0x38] sm:$0xff]
    %v256 = vld [vmem:[%s247 + $0x40] sm:$0xff]
    %v257 = vld [vmem:[%s247 + $0x48] sm:$0xff]
    %v258 = vld [vmem:[%s247 + $0x50] sm:$0xff]
    %v259 = vld [vmem:[%s247 + $0x58] sm:$0xff]
    %v260 = vld [vmem:[%s247 + $0x60] sm:$0xff]
    %v261 = vld [vmem:[%s247 + $0x68] sm:$0xff]
    %v262 = vld [vmem:[%s247 + $0x70] sm:$0xff]
    %v263 = vld [vmem:[%s247 + $0x78] sm:$0xff]
    %v264 = vld [vmem:[%s2 + $0x3] sm:$0x1]
    %v265 = vperm.slane %v264, 0
    %266 = vmatpush.msra.mxu0 %v263
    %267 = vmatpush.msra.mxu0 %v262
    %268 = vmatpush.msra.mxu0 %v261
    %269 = vmatpush.msra.mxu0 %v260
    %270 = vmatpush.msra.mxu0 %v259
    %271 = vmatpush.msra.mxu0 %v258
    %272 = vmatpush.msra.mxu0 %v257
    %273 = vmatpush.msra.mxu0 %v256
    %274 = vmatpush.msra.mxu0 %v255
    %275 = vmatpush.msra.mxu0 %v254
    %276 = vmatpush.msra.mxu0 %v253
    %277 = vmatpush.msra.mxu0 %v252
    %278 = vmatpush.msra.mxu0 %v251
    %279 = vmatpush.msra.mxu0 %v250
    %280 = vmatpush.msra.mxu0 %v249
    %281 = vmatpush.msra.mxu0 %v248
    %282 = vmatmul.f32.gmra.mxu0 %v246
    %v283 = vpop.f32.mrf.mxu0
    %v284 = vadd.f32 %v265, %v283
    %285 = vdwg.mxu0
    %v286 = vmul.f32 %v284, 0.01
    %v287 = vmax.f32 %v284, %v286
    %s288 = scalar_lea.vmem [#allocation2], 512
    %v289 = vld [vmem:[%s288] sm:$0xff]
    %v290 = vld [vmem:[%s288 + $0x8] sm:$0xff]
    %v291 = vld [vmem:[%s288 + $0x10] sm:$0xff]
    %v292 = vld [vmem:[%s288 + $0x18] sm:$0xff]
    %v293 = vld [vmem:[%s288 + $0x20] sm:$0xff]
    %v294 = vld [vmem:[%s288 + $0x28] sm:$0xff]
    %v295 = vld [vmem:[%s288 + $0x30] sm:$0xff]
    %v296 = vld [vmem:[%s288 + $0x38] sm:$0xff]
    %v297 = vld [vmem:[%s288 + $0x40] sm:$0xff]
    %v298 = vld [vmem:[%s288 + $0x48] sm:$0xff]
    %v299 = vld [vmem:[%s288 + $0x50] sm:$0xff]
    %v300 = vld [vmem:[%s288 + $0x58] sm:$0xff]
    %v301 = vld [vmem:[%s288 + $0x60] sm:$0xff]
    %v302 = vld [vmem:[%s288 + $0x68] sm:$0xff]
    %v303 = vld [vmem:[%s288 + $0x70] sm:$0xff]
    %v304 = vld [vmem:[%s288 + $0x78] sm:$0xff]
    %s305 = scalar_lea.vmem [#allocation2], 640
    %v306 = vld [vmem:[%s305] sm:$0xff]
    %v307 = vld [vmem:[%s305 + $0x8] sm:$0xff]
    %v308 = vld [vmem:[%s305 + $0x10] sm:$0xff]
    %v309 = vld [vmem:[%s305 + $0x18] sm:$0xff]
    %v310 = vld [vmem:[%s305 + $0x20] sm:$0xff]
    %v311 = vld [vmem:[%s305 + $0x28] sm:$0xff]
    %v312 = vld [vmem:[%s305 + $0x30] sm:$0xff]
    %v313 = vld [vmem:[%s305 + $0x38] sm:$0xff]
    %v314 = vld [vmem:[%s305 + $0x40] sm:$0xff]
    %v315 = vld [vmem:[%s305 + $0x48] sm:$0xff]
    %v316 = vld [vmem:[%s305 + $0x50] sm:$0xff]
    %v317 = vld [vmem:[%s305 + $0x58] sm:$0xff]
    %v318 = vld [vmem:[%s305 + $0x60] sm:$0xff]
    %v319 = vld [vmem:[%s305 + $0x68] sm:$0xff]
    %v320 = vld [vmem:[%s305 + $0x70] sm:$0xff]
    %v321 = vld [vmem:[%s305 + $0x78] sm:$0xff]
    %322 = vmatpush.msra.mxu0 %v321
    %323 = vmatpush.msra.mxu0 %v320
    %324 = vmatpush.msra.mxu0 %v319
    %325 = vmatpush.msra.mxu0 %v318
    %326 = vmatpush.msra.mxu0 %v317
    %327 = vmatpush.msra.mxu0 %v316
    %328 = vmatpush.msra.mxu0 %v315
    %329 = vmatpush.msra.mxu0 %v314
    %330 = vmatpush.msra.mxu0 %v313
    %331 = vmatpush.msra.mxu0 %v312
    %332 = vmatpush.msra.mxu0 %v311
    %333 = vmatpush.msra.mxu0 %v310
    %334 = vmatpush.msra.mxu0 %v309
    %335 = vmatpush.msra.mxu0 %v308
    %336 = vmatpush.msra.mxu0 %v307
    %337 = vmatpush.msra.mxu0 %v306
    %338 = vmatmul.f32.gmra.mxu0 %v30
    %v339 = vpop.f32.mrf.mxu0
    %v340 = vadd.f32 0.0, %v339
    %341 = vdwg.mxu0
    %342 = vmatpush.msra.mxu0 %v304
    %343 = vmatpush.msra.mxu0 %v303
    %344 = vmatpush.msra.mxu0 %v302
    %345 = vmatpush.msra.mxu0 %v301
    %346 = vmatpush.msra.mxu0 %v300
    %347 = vmatpush.msra.mxu0 %v299
    %348 = vmatpush.msra.mxu0 %v298
    %349 = vmatpush.msra.mxu0 %v297
    %350 = vmatpush.msra.mxu0 %v296
    %351 = vmatpush.msra.mxu0 %v295
    %352 = vmatpush.msra.mxu0 %v294
    %353 = vmatpush.msra.mxu0 %v293
    %354 = vmatpush.msra.mxu0 %v292
    %355 = vmatpush.msra.mxu0 %v291
    %356 = vmatpush.msra.mxu0 %v290
    %357 = vmatpush.msra.mxu0 %v289
    %358 = vmatmul.f32.gmra.mxu0 %v287
    %v359 = vpop.f32.mrf.mxu0
    %v360 = vadd.f32 %v340, %v359
    %361 = vdwg.mxu0
    %v362 = vld [vmem:[%s2 + $0x4] sm:$0x1]
    %v363 = vperm.slane %v362, 0
    %v364 = vadd.f32 %v360, %v363
    %v365 = vmul.f32 %v364, 0.01
    %v366 = vmax.f32 %v364, %v365
    %s367 = scalar_lea.vmem [#allocation2], 768
    %v368 = vld [vmem:[%s367] sm:$0xff]
    %v369 = vld [vmem:[%s367 + $0x8] sm:$0xff]
    %v370 = vld [vmem:[%s367 + $0x10] sm:$0xff]
    %v371 = vld [vmem:[%s367 + $0x18] sm:$0xff]
    %v372 = vld [vmem:[%s367 + $0x20] sm:$0xff]
    %v373 = vld [vmem:[%s367 + $0x28] sm:$0xff]
    %v374 = vld [vmem:[%s367 + $0x30] sm:$0xff]
    %v375 = vld [vmem:[%s367 + $0x38] sm:$0xff]
    %v376 = vld [vmem:[%s367 + $0x40] sm:$0xff]
    %v377 = vld [vmem:[%s367 + $0x48] sm:$0xff]
    %v378 = vld [vmem:[%s367 + $0x50] sm:$0xff]
    %v379 = vld [vmem:[%s367 + $0x58] sm:$0xff]
    %v380 = vld [vmem:[%s367 + $0x60] sm:$0xff]
    %v381 = vld [vmem:[%s367 + $0x68] sm:$0xff]
    %v382 = vld [vmem:[%s367 + $0x70] sm:$0xff]
    %v383 = vld [vmem:[%s367 + $0x78] sm:$0xff]
    %v384 = vld [vmem:[%s2 + $0x5] sm:$0x1]
    %v385 = vperm.slane %v384, 0
    %386 = vmatpush.msra.mxu0 %v383
    %387 = vmatpush.msra.mxu0 %v382
    %388 = vmatpush.msra.mxu0 %v381
    %389 = vmatpush.msra.mxu0 %v380
    %390 = vmatpush.msra.mxu0 %v379
    %391 = vmatpush.msra.mxu0 %v378
    %392 = vmatpush.msra.mxu0 %v377
    %393 = vmatpush.msra.mxu0 %v376
    %394 = vmatpush.msra.mxu0 %v375
    %395 = vmatpush.msra.mxu0 %v374
    %396 = vmatpush.msra.mxu0 %v373
    %397 = vmatpush.msra.mxu0 %v372
    %398 = vmatpush.msra.mxu0 %v371
    %399 = vmatpush.msra.mxu0 %v370
    %400 = vmatpush.msra.mxu0 %v369
    %401 = vmatpush.msra.mxu0 %v368
    %402 = vmatmul.f32.gmra.mxu0 %v366
    %v403 = vpop.f32.mrf.mxu0
    %v404 = vadd.f32 %v385, %v403
    %405 = vdwg.mxu0
    %v406 = vmul.f32 %v404, 0.01
    %v407 = vmax.f32 %v404, %v406
    %s408 = scalar_lea.vmem [#allocation2], 896
    %v409 = vld [vmem:[%s408] sm:$0xff]
    %v410 = vld [vmem:[%s408 + $0x8] sm:$0xff]
    %v411 = vld [vmem:[%s408 + $0x10] sm:$0xff]
    %v412 = vld [vmem:[%s408 + $0x18] sm:$0xff]
    %v413 = vld [vmem:[%s408 + $0x20] sm:$0xff]
    %v414 = vld [vmem:[%s408 + $0x28] sm:$0xff]
    %v415 = vld [vmem:[%s408 + $0x30] sm:$0xff]
    %v416 = vld [vmem:[%s408 + $0x38] sm:$0xff]
    %v417 = vld [vmem:[%s408 + $0x40] sm:$0xff]
    %v418 = vld [vmem:[%s408 + $0x48] sm:$0xff]
    %v419 = vld [vmem:[%s408 + $0x50] sm:$0xff]
    %v420 = vld [vmem:[%s408 + $0x58] sm:$0xff]
    %v421 = vld [vmem:[%s408 + $0x60] sm:$0xff]
    %v422 = vld [vmem:[%s408 + $0x68] sm:$0xff]
    %v423 = vld [vmem:[%s408 + $0x70] sm:$0xff]
    %v424 = vld [vmem:[%s408 + $0x78] sm:$0xff]
    %v425 = vld [vmem:[%s2 + $0x6] sm:$0x1]
    %v426 = vperm.slane %v425, 0
    %427 = vmatpush.msra.mxu0 %v424
    %428 = vmatpush.msra.mxu0 %v423
    %429 = vmatpush.msra.mxu0 %v422
    %430 = vmatpush.msra.mxu0 %v421
    %431 = vmatpush.msra.mxu0 %v420
    %432 = vmatpush.msra.mxu0 %v419
    %433 = vmatpush.msra.mxu0 %v418
    %434 = vmatpush.msra.mxu0 %v417
    %435 = vmatpush.msra.mxu0 %v416
    %436 = vmatpush.msra.mxu0 %v415
    %437 = vmatpush.msra.mxu0 %v414
    %438 = vmatpush.msra.mxu0 %v413
    %439 = vmatpush.msra.mxu0 %v412
    %440 = vmatpush.msra.mxu0 %v411
    %441 = vmatpush.msra.mxu0 %v410
    %442 = vmatpush.msra.mxu0 %v409
    %443 = vmatmul.f32.gmra.mxu0 %v407
    %v444 = vpop.f32.mrf.mxu0
    %v445 = vadd.f32 %v426, %v444
    %446 = vdwg.mxu0
    %447 = vst [vmem:[%s3] sm:$0xff] %v445
    // Predicated region
    $region18: #{chemgcn_forward.1} parent=1 // pred_check
      _
    $region19: #{chemgcn_forward.1} parent=1 // pred_check_branch
      %449 = sbr.rel (0) target = $region21
    $region20: #{chemgcn_forward.1} parent=1 // pred_region
      _
    $region21: #{chemgcn_forward.1} parent=1 // pred_fallthru
      _
    // Predicated region
    $region22: #{chemgcn_forward.1} parent=1 // pred_check
      _
    $region23: #{chemgcn_forward.1} parent=1 // pred_check_branch
      %451 = sbr.rel (0) target = $region25
    $region24: #{chemgcn_forward.1} parent=1 // pred_region
      _
    $region25: #{chemgcn_forward.1} parent=1 // pred_fallthru
      _
    %452 = vsyncpa [#allocation3], 1

</llo_original>
